<compile_context>
chip_gen: v5e
topology: v5e:2x2
jax: 0.10.0
libtpu: 0.0.40
codegen_flags: <defaults>
</compile_context>

<pallas_src>
import functools

import jax
import jax.numpy as jnp
from jax.experimental import pallas as pl
from jax.experimental.pallas import tpu as pltpu

EPS = 1e-5  # nn.BatchNorm2d default eps


def _convblock_kernel(patches_ref, w_ref, gamma_ref, beta_ref, out_ref,
                      sum_acc, sumsq_acc, scale_ref, shift_ref,
                      *, tile_m, inv_count):
    phase = pl.program_id(0)   # 0: batch statistics, 1: normalize + ReLU + pool
    tile = pl.program_id(1)    # M tile index

    @pl.when(jnp.logical_and(phase == 0, tile == 0))
    def _init_stats():
        sum_acc[...] = jnp.zeros_like(sum_acc)
        sumsq_acc[...] = jnp.zeros_like(sumsq_acc)

    # Conv2d(3x3, pad=1) for this tile as one lane-dense MXU matmul:
    #   (Cout, K=9*Cin) bf16 @ (K, 4*tile_m) bf16 -> f32 (Cout, 4*tile_m)
    # Columns are ordered (pool_parity, pooled_position).
    y = jnp.dot(w_ref[...], patches_ref[...], preferred_element_type=jnp.float32)

    @pl.when(phase == 0)
    def _accumulate_stats():
        sum_acc[...] += y
        sumsq_acc[...] += y * y

    @pl.when(jnp.logical_and(phase == 1, tile == 0))
    def _fold_bn():
        # Finalize biased batch stats over all N*H*W pre-pool positions, fold BN into scale/shift.
        mean = jnp.sum(sum_acc[...], axis=1, keepdims=True) * inv_count
        ex2 = jnp.sum(sumsq_acc[...], axis=1, keepdims=True) * inv_count
        var = ex2 - mean * mean
        scale = gamma_ref[...] * jax.lax.rsqrt(var + EPS)
        scale_ref[...] = scale
        shift_ref[...] = beta_ref[...] - mean * scale

    @pl.when(phase == 1)
    def _normalize_relu_pool():
        z = jnp.maximum(y * scale_ref[...] + shift_ref[...], 0.0)  # BN (folded) + ReLU
        # MaxPool2d(2,2): max over the 4 parity blocks (aligned lane slices).
        out_ref[...] = jnp.maximum(
            jnp.maximum(z[:, 0 * tile_m:1 * tile_m], z[:, 1 * tile_m:2 * tile_m]),
            jnp.maximum(z[:, 2 * tile_m:3 * tile_m], z[:, 3 * tile_m:4 * tile_m]),
        )


def _pick_tile_m(m):
    # Largest lane-dense tile that divides M; fall back to a single full-width tile.
    for tm in (512, 256, 128):
        if m % tm == 0:
            return tm
    return m


def conv_block_forward(x, w, b, gamma, beta):
    """x: (N, Cin, H, W) f32, w: (Cout, Cin, 3, 3), b/gamma/beta: (Cout,) -> (N, Cout, H//2, W//2)."""
    del b  # Conv bias is exactly cancelled by training-mode BatchNorm (mean absorbs it).
    N, Cin, H, W = x.shape
    Cout = w.shape[0]
    assert H % 2 == 0 and W % 2 == 0, "MaxPool2d(2,2) path assumes even spatial dims"
    Ho, Wo = H // 2, W // 2
    M = N * Ho * Wo
    K = 9 * Cin
    TM = _pick_tile_m(M)
    nT = M // TM

    # ---- glue: transposed im2col (K, 4*M), columns ordered (tile, pool_parity, position) ----
    xp = jnp.pad(x, ((0, 0), (0, 0), (1, 1), (1, 1)))
    shifted = jnp.stack(
        [jnp.stack([xp[:, :, dy:dy + H, dx:dx + W] for dx in range(3)], axis=1)
         for dy in range(3)],
        axis=1,
    )                                                  # (N, ky, kx, Cin, H, W)
    shifted = shifted.reshape(N, 3, 3, Cin, Ho, 2, Wo, 2)
    # -> (ky, kx, cin, ph, pw, n, ho, wo)
    pt = jnp.transpose(shifted, (1, 2, 3, 5, 7, 0, 4, 6)).reshape(K, 4, nT, TM)
    patches = jnp.transpose(pt, (0, 2, 1, 3)).reshape(K, 4 * M).astype(jnp.bfloat16)

    # conv weight as (Cout, K), K ordered (ky, kx, cin)
    wm = jnp.transpose(w, (0, 2, 3, 1)).reshape(Cout, K).astype(jnp.bfloat16)

    gamma2 = gamma.reshape(Cout, 1).astype(jnp.float32)
    beta2 = beta.reshape(Cout, 1).astype(jnp.float32)

    kernel = functools.partial(_convblock_kernel, tile_m=TM, inv_count=1.0 / (4.0 * M))

    flops = 2 * 2 * Cout * K * 4 * M               # conv matmul runs in both phases
    bytes_accessed = (2 * patches.size * 2         # bf16 patches, read once per phase
                      + wm.size * 2
                      + (gamma2.size + beta2.size) * 4
                      + Cout * M * 4)              # f32 pooled output

    out2d = pl.pallas_call(
        kernel,
        out_shape=jax.ShapeDtypeStruct((Cout, M), jnp.float32),
        grid_spec=pltpu.PrefetchScalarGridSpec(
            num_scalar_prefetch=0,
            grid=(2, nT),  # (phase, M tile)
            in_specs=[
                pl.BlockSpec((K, 4 * TM), lambda p, j: (0, j)),
                pl.BlockSpec((Cout, K), lambda p, j: (0, 0)),
                pl.BlockSpec((Cout, 1), lambda p, j: (0, 0)),
                pl.BlockSpec((Cout, 1), lambda p, j: (0, 0)),
            ],
            # p*j parks the output block at 0 during the stats phase -> no garbage write-backs.
            out_specs=pl.BlockSpec((Cout, TM), lambda p, j: (0, p * j)),
            scratch_shapes=[
                pltpu.VMEM((Cout, 4 * TM), jnp.float32),  # running per-channel sum
                pltpu.VMEM((Cout, 4 * TM), jnp.float32),  # running per-channel sum of squares
                pltpu.VMEM((Cout, 1), jnp.float32),       # folded BN scale
                pltpu.VMEM((Cout, 1), jnp.float32),       # folded BN shift
            ],
        ),
        compiler_params=pltpu.CompilerParams(
            # "arbitrary" on both axes: cross-tile stats live in per-core scratch, and phase 1
            # must see the completed phase-0 reduction.
            dimension_semantics=("arbitrary", "arbitrary"),
            vmem_limit_bytes=32 * 1024 * 1024,  # explicit budget; safe on v7x (64 MiB physical)
        ),
        cost_estimate=pl.CostEstimate(
            flops=flops, transcendentals=Cout, bytes_accessed=bytes_accessed),
    )(patches, wm, gamma2, beta2)

    # back to the PyTorch NCHW boundary
    return jnp.transpose(out2d.reshape(Cout, N, Ho, Wo), (1, 0, 2, 3))


def reference_forward(x, w, b, gamma, beta):
    """Pure-JAX reference matching the PyTorch ConvBlock forward (training-mode BN)."""
    y = jax.lax.conv_general_dilated(
        x, w, (1, 1), "SAME", dimension_numbers=("NCHW", "OIHW", "NCHW")
    ) + b[None, :, None, None]
    mean = jnp.mean(y, axis=(0, 2, 3), keepdims=True)
    var = jnp.mean(jnp.square(y - mean), axis=(0, 2, 3), keepdims=True)
    yn = (y - mean) / jnp.sqrt(var + EPS) * gamma[None, :, None, None] + beta[None, :, None, None]
    yr = jnp.maximum(yn, 0.0)
    n, c, h, w_ = yr.shape
    return yr.reshape(n, c, h // 2, 2, w_ // 2, 2).max(axis=(3, 5))


if __name__ == "__main__":
    N, Cin, Cout, H, W = 2, 4, 8, 16, 16

    key = jax.random.PRNGKey(0)
    kx, kw, kb = jax.random.split(key, 3)

    x = jax.random.normal(kx, (N, Cin, H, W), jnp.float32)

    # deterministic parameter init (PyTorch-like kaiming-uniform bounds; BN affine defaults)
    fan_in = Cin * 3 * 3
    bound = 1.0 / (fan_in ** 0.5)
    w = jax.random.uniform(kw, (Cout, Cin, 3, 3), jnp.float32, -bound, bound)
    b = jax.random.uniform(kb, (Cout,), jnp.float32, -bound, bound)
    gamma = jnp.ones((Cout,), jnp.float32)
    beta = jnp.zeros((Cout,), jnp.float32)

    out = conv_block_forward(x, w, b, gamma, beta)
    out = jax.block_until_ready(out)

    # Reference uses the same bf16-rounded operands the kernel consumes, isolating kernel
    # correctness from the intentional bf16 input quantization.
    x_q = x.astype(jnp.bfloat16).astype(jnp.float32)
    w_q = w.astype(jnp.bfloat16).astype(jnp.float32)
    ref = reference_forward(x_q, w_q, b, gamma, beta)

    assert out.shape == (N, Cout, H // 2, W // 2), out.shape
    max_err = float(jnp.max(jnp.abs(out - ref)))
    assert jnp.allclose(out, ref, atol=1e-3, rtol=1e-3), max_err

    print("KERNEL_OK")
</pallas_src>

<mosaic_0001>
module attributes {stable_mosaic.version = 11 : i64} {
  func.func @_convblock_kernel(%arg0: i32, %arg1: i32, %arg2: memref<36x512xbf16, #tpu.memory_space<vmem>>, %arg3: memref<8x36xbf16, #tpu.memory_space<vmem>>, %arg4: memref<8x1xf32, #tpu.memory_space<vmem>>, %arg5: memref<8x1xf32, #tpu.memory_space<vmem>>, %arg6: memref<8x128xf32, #tpu.memory_space<vmem>>, %arg7: memref<8x512xf32, #tpu.memory_space<vmem>>, %arg8: memref<8x512xf32, #tpu.memory_space<vmem>>, %arg9: memref<8x1xf32, #tpu.memory_space<vmem>>, %arg10: memref<8x1xf32, #tpu.memory_space<vmem>>) attributes {dimension_semantics = [#tpu.dimension_semantics<arbitrary>, #tpu.dimension_semantics<arbitrary>], iteration_bounds = array<i64: 2, 1>, scalar_prefetch = 0 : i64, scratch_operands = 4 : i64, tpu.core_type = #tpu.core_type<tc>, window_params = [{transform_indices = @transform_0, window_bounds = array<i64: 36, 512>}, {pipeline_mode = #tpu.pipeline_mode<synchronous>, transform_indices = @transform_1, window_bounds = array<i64: 8, 36>}, {pipeline_mode = #tpu.pipeline_mode<synchronous>, transform_indices = @transform_2, window_bounds = array<i64: 8, 1>}, {pipeline_mode = #tpu.pipeline_mode<synchronous>, transform_indices = @transform_3, window_bounds = array<i64: 8, 1>}, {transform_indices = @transform_4, window_bounds = array<i64: 8, 128>}]} {
    %c0_i32 = arith.constant 0 : i32
    %0 = arith.cmpi eq, %arg0, %c0_i32 : i32
    %c0_i32_0 = arith.constant 0 : i32
    %1 = arith.cmpi eq, %arg1, %c0_i32_0 : i32
    %2 = arith.andi %0, %1 : i1
    %3 = arith.extui %2 : i1 to i32
    %c0_i32_1 = arith.constant 0 : i32
    %4 = arith.cmpi ne, %3, %c0_i32_1 : i32
    scf.if %4 {
      %cst_11 = arith.constant 0.000000e+00 : f32
      %19 = vector.broadcast %cst_11 : f32 to vector<8x512xf32>
      %c0_12 = arith.constant 0 : index
      %c0_13 = arith.constant 0 : index
      %20 = vector.load %arg7[%c0_12, %c0_13] : memref<8x512xf32, #tpu.memory_space<vmem>>, vector<8x512xf32>
      tpu.vector_store %arg7[%c0_12, %c0_13], %19 {strides = array<i32>} : memref<8x512xf32, #tpu.memory_space<vmem>>, vector<8x512xf32>,
      %cst_14 = arith.constant 0.000000e+00 : f32
      %21 = vector.broadcast %cst_14 : f32 to vector<8x512xf32>
      %c0_15 = arith.constant 0 : index
      %c0_16 = arith.constant 0 : index
      %22 = vector.load %arg8[%c0_15, %c0_16] : memref<8x512xf32, #tpu.memory_space<vmem>>, vector<8x512xf32>
      tpu.vector_store %arg8[%c0_15, %c0_16], %21 {strides = array<i32>} : memref<8x512xf32, #tpu.memory_space<vmem>>, vector<8x512xf32>,
    } else {
    }
    %c0 = arith.constant 0 : index
    %c0_2 = arith.constant 0 : index
    %5 = vector.load %arg3[%c0, %c0_2] : memref<8x36xbf16, #tpu.memory_space<vmem>>, vector<8x36xbf16>
    %c0_3 = arith.constant 0 : index
    %c0_4 = arith.constant 0 : index
    %6 = vector.load %arg2[%c0_3, %c0_4] : memref<36x512xbf16, #tpu.memory_space<vmem>>, vector<36x512xbf16>
    %cst = arith.constant dense<0.000000e+00> : vector<8x512xf32>
    %7 = tpu.matmul %5, %6, %cst {dimension_numbers = #tpu.dot_dimension_numbers<[1], [0], [0], [1], [0, 0, 1, 1], [], []>} : vector<8x36xbf16>, vector<36x512xbf16>, vector<8x512xf32> -> vector<8x512xf32>
    %c0_i32_5 = arith.constant 0 : i32
    %8 = arith.cmpi eq, %arg0, %c0_i32_5 : i32
    %9 = arith.extui %8 : i1 to i32
    %c0_i32_6 = arith.constant 0 : i32
    %10 = arith.cmpi ne, %9, %c0_i32_6 : i32
    scf.if %10 {
      %c0_11 = arith.constant 0 : index
      %c0_12 = arith.constant 0 : index
      %19 = vector.load %arg7[%c0_11, %c0_12] : memref<8x512xf32, #tpu.memory_space<vmem>>, vector<8x512xf32>
      %20 = arith.addf %19, %7 : vector<8x512xf32>
      %c0_13 = arith.constant 0 : index
      %c0_14 = arith.constant 0 : index
      %21 = vector.load %arg7[%c0_13, %c0_14] : memref<8x512xf32, #tpu.memory_space<vmem>>, vector<8x512xf32>
      tpu.vector_store %arg7[%c0_13, %c0_14], %20 {strides = array<i32>} : memref<8x512xf32, #tpu.memory_space<vmem>>, vector<8x512xf32>,
      %c0_15 = arith.constant 0 : index
      %c0_16 = arith.constant 0 : index
      %22 = vector.load %arg8[%c0_15, %c0_16] : memref<8x512xf32, #tpu.memory_space<vmem>>, vector<8x512xf32>
      %23 = arith.mulf %7, %7 : vector<8x512xf32>
      %24 = arith.addf %22, %23 : vector<8x512xf32>
      %c0_17 = arith.constant 0 : index
      %c0_18 = arith.constant 0 : index
      %25 = vector.load %arg8[%c0_17, %c0_18] : memref<8x512xf32, #tpu.memory_space<vmem>>, vector<8x512xf32>
      tpu.vector_store %arg8[%c0_17, %c0_18], %24 {strides = array<i32>} : memref<8x512xf32, #tpu.memory_space<vmem>>, vector<8x512xf32>,
    } else {
    }
    %c1_i32 = arith.constant 1 : i32
    %11 = arith.cmpi eq, %arg0, %c1_i32 : i32
    %c0_i32_7 = arith.constant 0 : i32
    %12 = arith.cmpi eq, %arg1, %c0_i32_7 : i32
    %13 = arith.andi %11, %12 : i1
    %14 = arith.extui %13 : i1 to i32
    %c0_i32_8 = arith.constant 0 : i32
    %15 = arith.cmpi ne, %14, %c0_i32_8 : i32
    scf.if %15 {
      %c0_11 = arith.constant 0 : index
      %c0_12 = arith.constant 0 : index
      %19 = vector.load %arg7[%c0_11, %c0_12] : memref<8x512xf32, #tpu.memory_space<vmem>>, vector<8x512xf32>
      %cst_13 = arith.constant dense<0.000000e+00> : vector<8xf32>
      %20 = vector.multi_reduction <add>, %19, %cst_13 [1] : vector<8x512xf32> to vector<8xf32>
      %21 = vector.shape_cast %20 : vector<8xf32> to vector<8x1xf32>
      %cst_14 = arith.constant 0.001953125 : f32
      %22 = vector.broadcast %cst_14 : f32 to vector<8x1xf32>
      %23 = arith.mulf %21, %22 : vector<8x1xf32>
      %c0_15 = arith.constant 0 : index
      %c0_16 = arith.constant 0 : index
      %24 = vector.load %arg8[%c0_15, %c0_16] : memref<8x512xf32, #tpu.memory_space<vmem>>, vector<8x512xf32>
      %cst_17 = arith.constant dense<0.000000e+00> : vector<8xf32>
      %25 = vector.multi_reduction <add>, %24, %cst_17 [1] : vector<8x512xf32> to vector<8xf32>
      %26 = vector.shape_cast %25 : vector<8xf32> to vector<8x1xf32>
      %cst_18 = arith.constant 0.001953125 : f32
      %27 = vector.broadcast %cst_18 : f32 to vector<8x1xf32>
      %28 = arith.mulf %26, %27 : vector<8x1xf32>
      %29 = arith.mulf %23, %23 : vector<8x1xf32>
      %30 = arith.subf %28, %29 : vector<8x1xf32>
      %c0_19 = arith.constant 0 : index
      %c0_20 = arith.constant 0 : index
      %31 = vector.load %arg4[%c0_19, %c0_20] : memref<8x1xf32, #tpu.memory_space<vmem>>, vector<8x1xf32>
      %cst_21 = arith.constant 9.99999974E-6 : f32
      %32 = vector.broadcast %cst_21 : f32 to vector<8x1xf32>
      %33 = arith.addf %30, %32 : vector<8x1xf32>
      %34 = math.rsqrt %33 : vector<8x1xf32>
      %35 = arith.mulf %31, %34 : vector<8x1xf32>
      %c0_22 = arith.constant 0 : index
      %c0_23 = arith.constant 0 : index
      %36 = vector.load %arg9[%c0_22, %c0_23] : memref<8x1xf32, #tpu.memory_space<vmem>>, vector<8x1xf32>
      tpu.vector_store %arg9[%c0_22, %c0_23], %35 {strides = array<i32>} : memref<8x1xf32, #tpu.memory_space<vmem>>, vector<8x1xf32>,
      %c0_24 = arith.constant 0 : index
      %c0_25 = arith.constant 0 : index
      %37 = vector.load %arg5[%c0_24, %c0_25] : memref<8x1xf32, #tpu.memory_space<vmem>>, vector<8x1xf32>
      %38 = arith.mulf %23, %35 : vector<8x1xf32>
      %39 = arith.subf %37, %38 : vector<8x1xf32>
      %c0_26 = arith.constant 0 : index
      %c0_27 = arith.constant 0 : index
      %40 = vector.load %arg10[%c0_26, %c0_27] : memref<8x1xf32, #tpu.memory_space<vmem>>, vector<8x1xf32>
      tpu.vector_store %arg10[%c0_26, %c0_27], %39 {strides = array<i32>} : memref<8x1xf32, #tpu.memory_space<vmem>>, vector<8x1xf32>,
    } else {
    }
    %c1_i32_9 = arith.constant 1 : i32
    %16 = arith.cmpi eq, %arg0, %c1_i32_9 : i32
    %17 = arith.extui %16 : i1 to i32
    %c0_i32_10 = arith.constant 0 : i32
    %18 = arith.cmpi ne, %17, %c0_i32_10 : i32
    scf.if %18 {
      %c0_11 = arith.constant 0 : index
      %c0_12 = arith.constant 0 : index
      %19 = vector.load %arg9[%c0_11, %c0_12] : memref<8x1xf32, #tpu.memory_space<vmem>>, vector<8x1xf32>
      %20 = vector.broadcast %19 : vector<8x1xf32> to vector<8x512xf32>
      %21 = arith.mulf %7, %20 : vector<8x512xf32>
      %c0_13 = arith.constant 0 : index
      %c0_14 = arith.constant 0 : index
      %22 = vector.load %arg10[%c0_13, %c0_14] : memref<8x1xf32, #tpu.memory_space<vmem>>, vector<8x1xf32>
      %23 = vector.broadcast %22 : vector<8x1xf32> to vector<8x512xf32>
      %24 = arith.addf %21, %23 : vector<8x512xf32>
      %cst_15 = arith.constant 0.000000e+00 : f32
      %25 = vector.broadcast %cst_15 : f32 to vector<8x512xf32>
      %26 = arith.maximumf %24, %25 : vector<8x512xf32>
      %27 = vector.extract_strided_slice %26 {offsets = [0, 0], sizes = [8, 128], strides = [1, 1]} : vector<8x512xf32> to vector<8x128xf32>
      %28 = vector.extract_strided_slice %26 {offsets = [0, 128], sizes = [8, 128], strides = [1, 1]} : vector<8x512xf32> to vector<8x128xf32>
      %29 = arith.maximumf %27, %28 : vector<8x128xf32>
      %30 = vector.extract_strided_slice %26 {offsets = [0, 256], sizes = [8, 128], strides = [1, 1]} : vector<8x512xf32> to vector<8x128xf32>
      %31 = vector.extract_strided_slice %26 {offsets = [0, 384], sizes = [8, 128], strides = [1, 1]} : vector<8x512xf32> to vector<8x128xf32>
      %32 = arith.maximumf %30, %31 : vector<8x128xf32>
      %33 = arith.maximumf %29, %32 : vector<8x128xf32>
      %c0_16 = arith.constant 0 : index
      %c0_17 = arith.constant 0 : index
      %34 = vector.load %arg6[%c0_16, %c0_17] : memref<8x128xf32, #tpu.memory_space<vmem>>, vector<8x128xf32>
      tpu.vector_store %arg6[%c0_16, %c0_17], %33 {strides = array<i32>} : memref<8x128xf32, #tpu.memory_space<vmem>>, vector<8x128xf32>,
    } else {
    }
    return
  }
  func.func @transform_0(%arg0: i32, %arg1: i32) -> (i32, i32) {
    %c0_i32 = arith.constant 0 : i32
    %c0_i32_0 = arith.constant 0 : i32
    return %c0_i32, %arg1 : i32, i32
  }
  func.func @transform_1(%arg0: i32, %arg1: i32) -> (i32, i32) {
    %c0_i32 = arith.constant 0 : i32
    %c0_i32_0 = arith.constant 0 : i32
    %c0_i32_1 = arith.constant 0 : i32
    return %c0_i32, %c0_i32_0 : i32, i32
  }
  func.func @transform_2(%arg0: i32, %arg1: i32) -> (i32, i32) {
    %c0_i32 = arith.constant 0 : i32
    %c0_i32_0 = arith.constant 0 : i32
    %c0_i32_1 = arith.constant 0 : i32
    return %c0_i32, %c0_i32_0 : i32, i32
  }
  func.func @transform_3(%arg0: i32, %arg1: i32) -> (i32, i32) {
    %c0_i32 = arith.constant 0 : i32
    %c0_i32_0 = arith.constant 0 : i32
    %c0_i32_1 = arith.constant 0 : i32
    return %c0_i32, %c0_i32_0 : i32, i32
  }
  func.func @transform_4(%arg0: i32, %arg1: i32) -> (i32, i32) {
    %0 = arith.muli %arg0, %arg1 : i32
    %c0_i32 = arith.constant 0 : i32
    %c0_i32_0 = arith.constant 0 : i32
    return %c0_i32, %0 : i32, i32
  }
}

</mosaic_0001>

<llo_original>
// kernel: tpu_custom_call.1
$region0: #{tpu_custom_call.1}
  #allocation0 [shape = 'u32[]', space=smem, size = 0x4, offset = 0x4, fixed_abs, tag = 'smem constant byte address 0x4 - core index']
  #allocation1 [shape = 'u32[72,128]{1,0:T(1,128)}', space=vmem, size = 0x9000, scoped, tag = 'internal scratch']
  #allocation2 [shape = 'f32[8,512]{1,0:T(8,128)}', space=vmem, size = 0x4000, scoped, tag = 'scratch operand']
  #allocation3 [shape = 'f32[8,512]{1,0:T(8,128)}', space=vmem, size = 0x4000, scoped, tag = 'scratch operand']
  #allocation4 [shape = 'f32[8,1]{1,0:T(8,128)}', space=vmem, size = 0x1000, scoped, tag = 'scratch operand']
  #allocation5 [shape = 'f32[8,1]{1,0:T(8,128)}', space=vmem, size = 0x1000, scoped, tag = 'scratch operand']
  %s0 = inlined_call_operand.hbm [shape: bf16[36,512], index: 0, kind: input, shape index: {}]
  %s1 = inlined_call_operand.vmem [shape: bf16[8,36], index: 1, kind: input, shape index: {}]
  %s2 = inlined_call_operand.vmem [shape: f32[8,1], index: 2, kind: input, shape index: {}]
  %s3 = inlined_call_operand.vmem [shape: f32[8,1], index: 3, kind: input, shape index: {}]
  %s4 = inlined_call_operand.hbm [shape: f32[8,128], index: 4, kind: output, shape index: {}]
  %s5 = sld [smem:[#allocation0]]
  $region69: #{tpu_custom_call.1} parent=0
    _
  %s7 = ssub.s32 1, %s5
  %s8 = scalar_select 0, %s7, %s5
  $region1: #{tpu_custom_call.1} parent=0
    #allocation6 [shape = 'u8[40960]{0}', space=vmem, size = 0xa000, scoped, tag = 'input window, operand 0, single buffered']
    #allocation7 [shape = 's32[2]{0}', space=sflag, size = 0x8, scoped, tag = 'scoped memory for tpu_custom_call.1']
    #allocation8 [shape = 's32[2]{0}', space=sflag, size = 0x8, scoped, tag = 'scoped memory for tpu_custom_call.1']
    #allocation9 [shape = 'u8[8192]{0}', space=vmem, size = 0x2000, scoped, tag = 'output window, operand 0']
    %9 = vsyncpa [#allocation7], 0
    %10 = vsyncpa [#allocation8], 0
    %s11 = scalar_lea.sflag [#allocation8], 1
    %12 = vsyncpa %s11, 0
    loop: start=0, step=1, limit=4
    $region2: #{tpu_custom_call.1} parent=1 // loop_pre_header
      _
    $region3: #{tpu_custom_call.1} parent=1 // loop_header
      %s14 = sphi 0, %s18
      %p15 = scmp.ge.s32.totalorder %s14, 4
      %s21 = sphi 0, %s33
      %s22 = sphi 0, %s29
      %s23 = sphi 0, %s21
      %s24 = sphi 0, %s22
      %s25 = sphi 0, %s23
      %s26 = sphi 0, %s24
      %s36 = sphi 0, %s38
      %s39 = sphi 0, %s36
      %s40 = sphi 0, %s39
      %s56 = sphi 0, %s40
      %s60 = sphi 0, %s60
      %s62 = sphi 0, %s60
      %s63 = sphi 0, %s62
      %s77 = sphi 0, %s63
      %s81 = sphi 0, %s81
      %s83 = sphi 0, %s81
      %s84 = sphi 0, %s83
      %s98 = sphi 0, %s84
      %s102 = sphi 0, %s102
      %s104 = sphi 0, %s102
      %s105 = sphi 0, %s104
      %s119 = sphi 0, %s105
      %s127 = sphi 0, %s129
      %s130 = sphi 0, %s127
      %s131 = sphi 0, %s130
      %s147 = sphi 0, %s131
    $region4: #{tpu_custom_call.1} parent=1 // loop_header_branch
      %17 = sbr.rel (%p15) target = $region8
    $region5: #{tpu_custom_call.1} parent=1 // loop_body
      %s19 = ssub.s32 %s14, 1
      %s20 = ssub.s32 %s14, 2
      %s27 = sadd.s32 1, %s22
      %p28 = scmp.ge.s32.totalorder %s27, 1
      %s29 = scalar_select %p28, 0, %s27
      %s30 = sadd.s32 1, %s21
      %s31 = scalar_select %p28, %s30, %s21
      %p32 = scmp.ge.s32.totalorder %s31, 2
      %s33 = scalar_select %p32, 0, %s31
      %s34 = ssub.s32 %s22, %s29
      %p35 = scmp.eq.s32.totalorder %s34, 0
      %s37 = sadd.s32 %s36, 1
      %s38 = scalar_select %p35, %s36, %s37
      %p41 = pneg %p35
      %p42 = scmp.eq.s32.totalorder %s14, 1
      %p43 = por %p41, %p42
      %p44 = scmp.ne.s32.totalorder %s36, %s39
      %p45 = scmp.eq.s32.totalorder %s14, 0
      %p46 = por %p44, %p45
      %p47 = scmp.ne.s32.totalorder %s36, %s39
      %p48 = scmp.eq.s32.totalorder %s19, 1
      %p49 = por %p47, %p48
      %p50 = scmp.ne.s32.totalorder %s39, %s40
      %p51 = scmp.eq.s32.totalorder %s19, 0
      %p52 = por %p50, %p51
      %p53 = scmp.ne.s32.totalorder %s39, %s40
      %p54 = scmp.eq.s32.totalorder %s20, 1
      %p55 = por %p53, %p54
      %p57 = scmp.ne.s32.totalorder %s40, %s56
      %p58 = scmp.eq.s32.totalorder %s20, 0
      %p59 = por %p57, %p58
      %s61 = sadd.s32 %s60, 1
      %p64 = scmp.eq.s32.totalorder %s14, 1
      %p65 = scmp.ne.s32.totalorder %s60, %s62
      %p66 = scmp.eq.s32.totalorder %s14, 0
      %p67 = por %p65, %p66
      %p68 = scmp.ne.s32.totalorder %s60, %s62
      %p69 = scmp.eq.s32.totalorder %s19, 1
      %p70 = por %p68, %p69
      %p71 = scmp.ne.s32.totalorder %s62, %s63
      %p72 = scmp.eq.s32.totalorder %s19, 0
      %p73 = por %p71, %p72
      %p74 = scmp.ne.s32.totalorder %s62, %s63
      %p75 = scmp.eq.s32.totalorder %s20, 1
      %p76 = por %p74, %p75
      %p78 = scmp.ne.s32.totalorder %s63, %s77
      %p79 = scmp.eq.s32.totalorder %s20, 0
      %p80 = por %p78, %p79
      %s82 = sadd.s32 %s81, 1
      %p85 = scmp.eq.s32.totalorder %s14, 1
      %p86 = scmp.ne.s32.totalorder %s81, %s83
      %p87 = scmp.eq.s32.totalorder %s14, 0
      %p88 = por %p86, %p87
      %p89 = scmp.ne.s32.totalorder %s81, %s83
      %p90 = scmp.eq.s32.totalorder %s19, 1
      %p91 = por %p89, %p90
      %p92 = scmp.ne.s32.totalorder %s83, %s84
      %p93 = scmp.eq.s32.totalorder %s19, 0
      %p94 = por %p92, %p93
      %p95 = scmp.ne.s32.totalorder %s83, %s84
      %p96 = scmp.eq.s32.totalorder %s20, 1
      %p97 = por %p95, %p96
      %p99 = scmp.ne.s32.totalorder %s84, %s98
      %p100 = scmp.eq.s32.totalorder %s20, 0
      %p101 = por %p99, %p100
      %s103 = sadd.s32 %s102, 1
      %p106 = scmp.eq.s32.totalorder %s14, 1
      %p107 = scmp.ne.s32.totalorder %s102, %s104
      %p108 = scmp.eq.s32.totalorder %s14, 0
      %p109 = por %p107, %p108
      %p110 = scmp.ne.s32.totalorder %s102, %s104
      %p111 = scmp.eq.s32.totalorder %s19, 1
      %p112 = por %p110, %p111
      %p113 = scmp.ne.s32.totalorder %s104, %s105
      %p114 = scmp.eq.s32.totalorder %s19, 0
      %p115 = por %p113, %p114
      %p116 = scmp.ne.s32.totalorder %s104, %s105
      %p117 = scmp.eq.s32.totalorder %s20, 1
      %p118 = por %p116, %p117
      %p120 = scmp.ne.s32.totalorder %s105, %s119
      %p121 = scmp.eq.s32.totalorder %s20, 0
      %p122 = por %p120, %p121
      %s123 = smul.u32 %s21, %s22
      %s124 = smul.u32 %s33, %s29
      %s125 = ssub.s32 %s123, %s124
      %p126 = scmp.eq.s32.totalorder %s125, 0
      %s128 = sadd.s32 %s127, 1
      %s129 = scalar_select %p126, %s127, %s128
      %p132 = pneg %p126
      %p133 = scmp.eq.s32.totalorder %s14, 1
      %p134 = por %p132, %p133
      %p135 = scmp.ne.s32.totalorder %s127, %s130
      %p136 = scmp.eq.s32.totalorder %s14, 0
      %p137 = por %p135, %p136
      %p138 = scmp.ne.s32.totalorder %s127, %s130
      %p139 = scmp.eq.s32.totalorder %s19, 1
      %p140 = por %p138, %p139
      %p141 = scmp.ne.s32.totalorder %s130, %s131
      %p142 = scmp.eq.s32.totalorder %s19, 0
      %p143 = por %p141, %p142
      %p144 = scmp.ne.s32.totalorder %s130, %s131
      %p145 = scmp.eq.s32.totalorder %s20, 1
      %p146 = por %p144, %p145
      %p148 = scmp.ne.s32.totalorder %s131, %s147
      %p149 = scmp.eq.s32.totalorder %s20, 0
      %p150 = por %p148, %p149
      %p151 = scmp.le.s32.totalorder 1, %s14
      %p152 = scmp.lt.s32.totalorder %s14, 3
      %p153 = pnand %p151, %p152
      %p154 = pneg %p153
      // Predicated region
      $region9: #{tpu_custom_call.1} parent=5 // pred_check
        _
      $region10: #{tpu_custom_call.1} parent=5 // pred_check_branch
        %156 = sbr.rel (%p153) target = $region12
      $region11: #{tpu_custom_call.1} parent=5 // pred_region
        %s157 = ssub.s32 %s14, 1
        // Predicated region
        $region13: #{tpu_custom_call.1} parent=11 // pred_check
          %p158 = pneg %p52
        $region14: #{tpu_custom_call.1} parent=11 // pred_check_branch
          %160 = sbr.rel (%p158) target = $region16
        $region15: #{tpu_custom_call.1} parent=11 // pred_region
          %s161 = smul.u32 4, %s24
          %163 = vsyncadd [#allocation7], 0
          %s164 = smul.addr %s161, 4
          %s165 = scalar_lea.hbm %s0, %s164
          %s166 = sshll.u32 %s165, 4
          %s167 = int_to_ptr.hbm [resolvable:$true] %s166
          %s168 = sshll.u32 [#allocation6], 4
          %s169 = int_to_ptr.vmem [resolvable:$true] %s168
          %174 = dma.hbm_to_vmem [thread:$0]  %s167, 1280, %s169, [#allocation7], 256, 256, 16
        $region16: #{tpu_custom_call.1} parent=11 // pred_fallthru
          _
        // Predicated region
        $region17: #{tpu_custom_call.1} parent=11 // pred_check
          %p175 = pneg %p73
        $region18: #{tpu_custom_call.1} parent=11 // pred_check_branch
          %177 = sbr.rel (%p175) target = $region20
        $region19: #{tpu_custom_call.1} parent=11 // pred_region
          _
        $region20: #{tpu_custom_call.1} parent=11 // pred_fallthru
          _
        // Predicated region
        $region21: #{tpu_custom_call.1} parent=11 // pred_check
          %p178 = pneg %p94
        $region22: #{tpu_custom_call.1} parent=11 // pred_check_branch
          %180 = sbr.rel (%p178) target = $region24
        $region23: #{tpu_custom_call.1} parent=11 // pred_region
          _
        $region24: #{tpu_custom_call.1} parent=11 // pred_fallthru
          _
        // Predicated region
        $region25: #{tpu_custom_call.1} parent=11 // pred_check
          %p181 = pneg %p115
        $region26: #{tpu_custom_call.1} parent=11 // pred_check_branch
          %183 = sbr.rel (%p181) target = $region28
        $region27: #{tpu_custom_call.1} parent=11 // pred_region
          _
        $region28: #{tpu_custom_call.1} parent=11 // pred_fallthru
          _
      $region12: #{tpu_custom_call.1} parent=5 // pred_fallthru
        _
      %p184 = scmp.lt.s32.totalorder %s14, 2
      // Predicated region
      $region29: #{tpu_custom_call.1} parent=5 // pred_check
        %p185 = pneg %p184
      $region30: #{tpu_custom_call.1} parent=5 // pred_check_branch
        %187 = sbr.rel (%p185) target = $region32
      $region31: #{tpu_custom_call.1} parent=5 // pred_region
        _
      $region32: #{tpu_custom_call.1} parent=5 // pred_fallthru
        _
      %p188 = scmp.le.s32.totalorder 1, %s14
      %p189 = scmp.lt.s32.totalorder %s14, 3
      %p190 = pnand %p188, %p189
      %p191 = pneg %p190
      // Predicated region
      $region33: #{tpu_custom_call.1} parent=5 // pred_check
        _
      $region34: #{tpu_custom_call.1} parent=5 // pred_check_branch
        %193 = sbr.rel (%p190) target = $region36
      $region35: #{tpu_custom_call.1} parent=5 // pred_region
        %s194 = ssub.s32 %s14, 1
        // Predicated region
        $region37: #{tpu_custom_call.1} parent=35 // pred_check
          %p195 = pneg %p52
        $region38: #{tpu_custom_call.1} parent=35 // pred_check_branch
          %197 = sbr.rel (%p195) target = $region40
        $region39: #{tpu_custom_call.1} parent=35 // pred_region
          %199 = dma.done [#allocation7], 1280
        $region40: #{tpu_custom_call.1} parent=35 // pred_fallthru
          _
        %p200 = pneg %p52
        %p201 = pneg %p49
        %p202 = pneg %p73
        %p203 = pneg %p70
        %p204 = pneg %p94
        %p205 = pneg %p91
        %p206 = pneg %p115
        %p207 = pneg %p112
        %p208 = pneg %p143
        %p209 = pneg %p140
        %s210 = sand.u32 %s130, 1
        %s211 = scalar_lea.sflag [#allocation8], %s210
        %s212 = sand.u32 %s130, 1
        %s213 = smul.addr %s212, 8
        %s214 = scalar_lea.vmem [#allocation9], %s213
        %s215 = smul.u32 4, %s24
        %s216 = smul.u32 %s23, %s24
        %p218 = scmp.eq.s32.totalorder %s23, 0
        %p219 = scmp.eq.s32.totalorder %s24, 0
        %p220 = pnand %p218, %p219
        %p221 = pneg %p220
        // Predicated region
        $region41: #{tpu_custom_call.1} parent=35 // pred_check
          _
        $region42: #{tpu_custom_call.1} parent=35 // pred_check_branch
          %223 = sbr.rel (%p220) target = $region44
        $region43: #{tpu_custom_call.1} parent=35 // pred_region
          %224 = vst [vmem:[#allocation2] sm:$0xff] 0.0
          %225 = vst [vmem:[#allocation2 + $0x8] sm:$0xff] 0.0
          %226 = vst [vmem:[#allocation2 + $0x10] sm:$0xff] 0.0
          %227 = vst [vmem:[#allocation2 + $0x18] sm:$0xff] 0.0
          %228 = vst [vmem:[#allocation3] sm:$0xff] 0.0
          %229 = vst [vmem:[#allocation3 + $0x8] sm:$0xff] 0.0
          %230 = vst [vmem:[#allocation3 + $0x10] sm:$0xff] 0.0
          %231 = vst [vmem:[#allocation3 + $0x18] sm:$0xff] 0.0
        $region44: #{tpu_custom_call.1} parent=35 // pred_fallthru
          _
        %v232 = vld [vmem:[%s1] sm:$0xf]
        %v233 = vld [vmem:[#allocation6] sm:$0xff]
        %v234 = vld [vmem:[#allocation6 + $0x8] sm:$0xff]
        %v235 = vld [vmem:[#allocation6 + $0x10] sm:$0xff]
        %v236 = vld [vmem:[#allocation6 + $0x18] sm:$0xff]
        %v237 = vld [vmem:[#allocation6 + $0x20] sm:$0xff]
        %v238 = vld [vmem:[#allocation6 + $0x28] sm:$0xff]
        %v239 = vld [vmem:[#allocation6 + $0x30] sm:$0xff]
        %v240 = vld [vmem:[#allocation6 + $0x38] sm:$0xff]
        %v241 = vld [vmem:[#allocation6 + $0x40] sm:$0x33]
        %v242 = vld [vmem:[#allocation6 + $0x48] sm:$0x33]
        %v253 = vunpack.c.l.b16 %v233
        %v254 = vunpack.c.h.b16 %v233
        %v255 = vunpack.c.l.b16 %v234
        %v256 = vunpack.c.h.b16 %v234
        %v257 = vunpack.c.l.b16 %v235
        %v258 = vunpack.c.h.b16 %v235
        %v259 = vunpack.c.l.b16 %v236
        %v260 = vunpack.c.h.b16 %v236
        %v261 = vunpack.c.l.b16 %v237
        %v262 = vunpack.c.h.b16 %v237
        %v263 = vunpack.c.l.b16 %v238
        %v264 = vunpack.c.h.b16 %v238
        %v265 = vunpack.c.l.b16 %v239
        %v266 = vunpack.c.h.b16 %v239
        %v267 = vunpack.c.l.b16 %v240
        %v268 = vunpack.c.h.b16 %v240
        %v269 = vunpack.c.l.b16 %v241
        %v270 = vunpack.c.h.b16 %v241
        %v271 = vunpack.c.l.b16 %v242
        %v272 = vunpack.c.h.b16 %v242
        %v273 = vpack.c.b16 %v257, %v253
        %v274 = vpack.c.b16 %v258, %v254
        %v275 = vpack.c.b16 %v259, %v255
        %v276 = vpack.c.b16 %v260, %v256
        %v277 = vpack.c.b16 %v265, %v261
        %v278 = vpack.c.b16 %v266, %v262
        %v279 = vpack.c.b16 %v267, %v263
        %v280 = vpack.c.b16 %v268, %v264
        %v281 = vpack.c.b16 %v269, %v269
        %v282 = vpack.c.b16 %v270, %v270
        %v283 = vpack.c.b16 %v271, %v271
        %v284 = vpack.c.b16 %v272, %v272
        %vm293 = vcmask 293888
        %v295 = vsel %vm293, %v232, 0
        %vm297 = vcmask 1041408
        %v299 = vsel %vm297, %v281, 0
        %v302 = vsel %vm297, %v282, 0
        %v305 = vsel %vm297, %v283, 0
        %v308 = vsel %vm297, %v284, 0
        %310 = vmatpush.bf16.msra.mxu0 0
        %311 = vmatpush.bf16.msra.mxu0 0
        %312 = vmatpush.bf16.msra.mxu0 0
        %313 = vmatpush.bf16.msra.mxu0 0
        %314 = vmatpush.bf16.msra.mxu0 0
        %315 = vmatpush.bf16.msra.mxu0 %v299
        %316 = vmatpush.bf16.msra.mxu0 %v277
        %317 = vmatpush.bf16.msra.mxu0 %v273
        %318 = vmatmul.bf16.gmra.mxu0 %v295
        %v319 = vpop.f32.mrf.mxu0
        %v320 = vadd.f32 0.0, %v319
        %v321 = vpop.f32.mrf.mxu0
        %322 = vdwg.mxu0
        %323 = vmatpush.bf16.msra.mxu0 0
        %324 = vmatpush.bf16.msra.mxu0 0
        %325 = vmatpush.bf16.msra.mxu0 0
        %326 = vmatpush.bf16.msra.mxu0 0
        %327 = vmatpush.bf16.msra.mxu0 0
        %328 = vmatpush.bf16.msra.mxu0 %v302
        %329 = vmatpush.bf16.msra.mxu0 %v278
        %330 = vmatpush.bf16.msra.mxu0 %v274
        %331 = vmatmul.bf16.gmra.mxu0 %v295
        %v332 = vpop.f32.mrf.mxu0
        %v333 = vadd.f32 0.0, %v332
        %v334 = vpop.f32.mrf.mxu0
        %335 = vdwg.mxu0
        %336 = vmatpush.bf16.msra.mxu0 0
        %337 = vmatpush.bf16.msra.mxu0 0
        %338 = vmatpush.bf16.msra.mxu0 0
        %339 = vmatpush.bf16.msra.mxu0 0
        %340 = vmatpush.bf16.msra.mxu0 0
        %341 = vmatpush.bf16.msra.mxu0 %v305
        %342 = vmatpush.bf16.msra.mxu0 %v279
        %343 = vmatpush.bf16.msra.mxu0 %v275
        %344 = vmatmul.bf16.gmra.mxu0 %v295
        %v345 = vpop.f32.mrf.mxu0
        %v346 = vadd.f32 0.0, %v345
        %v347 = vpop.f32.mrf.mxu0
        %348 = vdwg.mxu0
        %349 = vmatpush.bf16.msra.mxu0 0
        %350 = vmatpush.bf16.msra.mxu0 0
        %351 = vmatpush.bf16.msra.mxu0 0
        %352 = vmatpush.bf16.msra.mxu0 0
        %353 = vmatpush.bf16.msra.mxu0 0
        %354 = vmatpush.bf16.msra.mxu0 %v308
        %355 = vmatpush.bf16.msra.mxu0 %v280
        %356 = vmatpush.bf16.msra.mxu0 %v276
        %357 = vmatmul.bf16.gmra.mxu0 %v295
        %v358 = vpop.f32.mrf.mxu0
        %v359 = vadd.f32 0.0, %v358
        %v360 = vpop.f32.mrf.mxu0
        %361 = vdwg.mxu0
        // Predicated region
        $region45: #{tpu_custom_call.1} parent=35 // pred_check
          %p362 = pneg %p218
        $region46: #{tpu_custom_call.1} parent=35 // pred_check_branch
          %364 = sbr.rel (%p362) target = $region48
        $region47: #{tpu_custom_call.1} parent=35 // pred_region
          %v365 = vld [vmem:[#allocation2] sm:$0xff]
          %v366 = vld [vmem:[#allocation2 + $0x8] sm:$0xff]
          %v367 = vld [vmem:[#allocation2 + $0x10] sm:$0xff]
          %v368 = vld [vmem:[#allocation2 + $0x18] sm:$0xff]
          %v369 = vadd.f32 %v365, %v320
          %v370 = vadd.f32 %v366, %v333
          %v371 = vadd.f32 %v367, %v346
          %v372 = vadd.f32 %v368, %v359
          %373 = vst [vmem:[#allocation2] sm:$0xff] %v369
          %374 = vst [vmem:[#allocation2 + $0x8] sm:$0xff] %v370
          %375 = vst [vmem:[#allocation2 + $0x10] sm:$0xff] %v371
          %376 = vst [vmem:[#allocation2 + $0x18] sm:$0xff] %v372
          %v377 = vld [vmem:[#allocation3] sm:$0xff]
          %v378 = vld [vmem:[#allocation3 + $0x8] sm:$0xff]
          %v379 = vld [vmem:[#allocation3 + $0x10] sm:$0xff]
          %v380 = vld [vmem:[#allocation3 + $0x18] sm:$0xff]
          %v381 = vmul.f32 %v320, %v320
          %v382 = vmul.f32 %v333, %v333
          %v383 = vmul.f32 %v346, %v346
          %v384 = vmul.f32 %v359, %v359
          %v385 = vadd.f32 %v377, %v381
          %v386 = vadd.f32 %v378, %v382
          %v387 = vadd.f32 %v379, %v383
          %v388 = vadd.f32 %v380, %v384
          %389 = vst [vmem:[#allocation3] sm:$0xff] %v385
          %390 = vst [vmem:[#allocation3 + $0x8] sm:$0xff] %v386
          %391 = vst [vmem:[#allocation3 + $0x10] sm:$0xff] %v387
          %392 = vst [vmem:[#allocation3 + $0x18] sm:$0xff] %v388
        $region48: #{tpu_custom_call.1} parent=35 // pred_fallthru
          _
        %p393 = scmp.eq.s32.totalorder %s23, 1
        %p394 = pnand %p393, %p219
        %p395 = pneg %p394
        // Predicated region
        $region49: #{tpu_custom_call.1} parent=35 // pred_check
          _
        $region50: #{tpu_custom_call.1} parent=35 // pred_check_branch
          %397 = sbr.rel (%p394) target = $region52
        $region51: #{tpu_custom_call.1} parent=35 // pred_region
          %v398 = vld [vmem:[#allocation2] sm:$0xff]
          %v399 = vld [vmem:[#allocation2 + $0x8] sm:$0xff]
          %v400 = vld [vmem:[#allocation2 + $0x10] sm:$0xff]
          %v401 = vld [vmem:[#allocation2 + $0x18] sm:$0xff]
          %v402 = vadd.f32 %v398, %v399
          %v403 = vadd.f32 %v402, %v400
          %v404 = vadd.f32 %v403, %v401
          %405 = vadd.xlane.f32.xlu0 %v404
          %v406 = vpop.xlane.xlu0 %405
          %v407 = vmul.f32 %v406, 0.001953125
          %v408 = vld [vmem:[#allocation3] sm:$0xff]
          %v409 = vld [vmem:[#allocation3 + $0x8] sm:$0xff]
          %v410 = vld [vmem:[#allocation3 + $0x10] sm:$0xff]
          %v411 = vld [vmem:[#allocation3 + $0x18] sm:$0xff]
          %v412 = vadd.f32 %v408, %v409
          %v413 = vadd.f32 %v412, %v410
          %v414 = vadd.f32 %v413, %v411
          %415 = vadd.xlane.f32.xlu0 %v414
          %v416 = vpop.xlane.xlu0 %415
          %v417 = vmul.f32 %v416, 0.001953125
          %v418 = vmul.f32 %v407, %v407
          %v419 = vsub.f32 %v417, %v418
          %v420 = vld [vmem:[%s2] sm:$0xff]
          %v421 = vadd.f32 %v419, 1e-05
          %v422 = vrsqrt.pop %v421
          %v423 = vmul.f32 %v422, %v421
          %v424 = vmul.f32 %v423, %v422
          %v425 = vmul.f32 0.5, %v424
          %v426 = vsub.f32 1.5, %v425
          %v427 = vmul.f32 %v422, %v426
          %vm428 = vweird.f32 %v421
          %vm429 = vweird.f32 %v422
          %vm430 = vmor %vm428, %vm429
          %v431 = vsel %vm430, %v422, %v427
          %v432 = vmul.f32 %v420, %v431
          %vm433 = vcmask 7168
          %434 = vst.msk [vmem:[#allocation4] sm:$0xff] %vm433, %v432
          %v435 = vld [vmem:[%s3] sm:$0xff]
          %v436 = vmul.f32 %v407, %v432
          %v437 = vsub.f32 %v435, %v436
          %438 = vst.msk [vmem:[#allocation5] sm:$0xff] %vm433, %v437
        $region52: #{tpu_custom_call.1} parent=35 // pred_fallthru
          _
        // Predicated region
        $region53: #{tpu_custom_call.1} parent=35 // pred_check
          %p439 = pneg %p393
        $region54: #{tpu_custom_call.1} parent=35 // pred_check_branch
          %441 = sbr.rel (%p439) target = $region56
        $region55: #{tpu_custom_call.1} parent=35 // pred_region
          %v442 = vld [vmem:[#allocation4] sm:$0xff]
          %444 = vset.pattern.permute.xlu0 0
          %445 = vperm.xlu0 %444, %v442
          %v446 = vpop.permute.xlu0 %445
          %v448 = vmul.f32 %v320, %v446
          %v449 = vmul.f32 %v333, %v446
          %v450 = vmul.f32 %v346, %v446
          %v451 = vmul.f32 %v359, %v446
          %v452 = vld [vmem:[#allocation5] sm:$0xff]
          %454 = vset.pattern.permute.xlu0 0
          %455 = vperm.xlu0 %454, %v452
          %v456 = vpop.permute.xlu0 %455
          %v458 = vadd.f32 %v448, %v456
          %v459 = vadd.f32 %v449, %v456
          %v460 = vadd.f32 %v450, %v456
          %v461 = vadd.f32 %v451, %v456
          %v462 = vmax.f32 %v458, 0.0
          %v463 = vmax.f32 %v459, 0.0
          %v464 = vmax.f32 %v460, 0.0
          %v465 = vmax.f32 %v461, 0.0
          %v466 = vmax.f32 %v462, %v463
          %v467 = vmax.f32 %v464, %v465
          %v468 = vmax.f32 %v466, %v467
          %469 = vst [vmem:[%s214] sm:$0xff] %v468
        $region56: #{tpu_custom_call.1} parent=35 // pred_fallthru
          _
        %s470 = sand.u32 %s130, 1
        %s471 = scalar_lea.sflag [#allocation8], %s470
        %s472 = sand.u32 %s130, 1
        %s473 = smul.addr %s472, 8
        %s474 = scalar_lea.vmem [#allocation9], %s473
        // Predicated region
        $region57: #{tpu_custom_call.1} parent=35 // pred_check
          %p475 = pneg %p140
        $region58: #{tpu_custom_call.1} parent=35 // pred_check_branch
          %477 = sbr.rel (%p475) target = $region60
        $region59: #{tpu_custom_call.1} parent=35 // pred_region
          %s478 = smul.u32 %s23, %s24
          %480 = vsyncadd %s471, 0
          %s481 = smul.addr %s478, 8
          %s482 = scalar_lea.hbm %s4, %s481
          %s484 = sshll.u32 %s474, 4
          %s485 = int_to_ptr.vmem [resolvable:$true] %s484
          %s486 = sshll.u32 %s482, 4
          %s487 = int_to_ptr.hbm [resolvable:$true] %s486
          %489 = dma.vmem_to_hbm [thread:$0]  %s485, 128, %s487, %s471
        $region60: #{tpu_custom_call.1} parent=35 // pred_fallthru
          _
      $region36: #{tpu_custom_call.1} parent=5 // pred_fallthru
        _
      %p490 = scmp.le.s32.totalorder 2, %s14
      // Predicated region
      $region61: #{tpu_custom_call.1} parent=5 // pred_check
        %p491 = pneg %p490
      $region62: #{tpu_custom_call.1} parent=5 // pred_check_branch
        %493 = sbr.rel (%p491) target = $region64
      $region63: #{tpu_custom_call.1} parent=5 // pred_region
        %s494 = ssub.s32 %s14, 2
        // Predicated region
        $region65: #{tpu_custom_call.1} parent=63 // pred_check
          %p495 = pneg %p146
        $region66: #{tpu_custom_call.1} parent=63 // pred_check_branch
          %497 = sbr.rel (%p495) target = $region68
        $region67: #{tpu_custom_call.1} parent=63 // pred_region
          %s498 = sand.u32 %s131, 1
          %s499 = scalar_lea.sflag [#allocation8], %s498
          %s500 = sand.u32 %s131, 1
          %s501 = smul.addr %s500, 8
          %s502 = scalar_lea.vmem [#allocation9], %s501
          %504 = dma.done %s499, 128
        $region68: #{tpu_custom_call.1} parent=63 // pred_fallthru
          _
      $region64: #{tpu_custom_call.1} parent=5 // pred_fallthru
        _
    $region6: #{tpu_custom_call.1} parent=1 // loop_footer
      %s18 = sadd.s32 1, %s14
    $region7: #{tpu_custom_call.1} parent=1 // loop_footer_branch
      %13 = sbr.rel target = $region3
    $region8: #{tpu_custom_call.1} parent=1 // loop_exit
      _
    %505 = vsyncpa [#allocation7], 1
    %s506 = scalar_lea.sflag [#allocation7], 1
    %507 = vsyncpa %s506, 1
    %508 = vsyncpa [#allocation8], 1
    %s509 = scalar_lea.sflag [#allocation8], 1
    %510 = vsyncpa %s509, 1

</llo_original>
